<compile_context>
chip_gen: v7x
topology: tpu7x:2x2x1
jax: 0.10.0
libtpu: 0.0.40
codegen_flags: <defaults>
</compile_context>

<pallas_src>
import jax
import jax.numpy as jnp
from jax.experimental import pallas as pl
from jax.experimental.pallas import tpu as pltpu  # noqa: F401  (kept for TPU backend import)


C_PAD = 128  # lane-dense padded output width (c_out <= C_PAD)


# -----------------------------------------------------------------------------
# Fused uncertainty kernel: all Monte-Carlo samples + mean/var/std in one launch
# -----------------------------------------------------------------------------
def _bayesian_forward_kernel(dec_ref, base_rows_ref, w_emb_ref, b_emb_ref,
                             w_mu_ref, sigma_wb_ref, eps_wb_ref,
                             w_q_ref, b_q_ref, w_q_bd_ref,
                             pred_ref, mean_ref, var_ref, std_ref):
    S, B, P, CP = pred_ref.shape
    BP = B * P
    D = w_mu_ref.shape[0]

    # ---- sample-invariant work (computed exactly once) -------------------------
    # decoder embedding: Linear + GELU (tanh approx; TODO(synk): torch default is
    # exact erf GELU — stand-in embedding, tanh kept for Mosaic lowering)
    h = jnp.dot(dec_ref[...], w_emb_ref[...],
                preferred_element_type=jnp.float32) + b_emb_ref[...]
    h = jax.nn.gelu(h, approximate=True)                       # [B*P, d_model]

    w_q = w_q_ref[...]                                          # [c_eval, 128]
    # base = h @ (w_mu @ w_q) + (trend + b_mu) @ w_q + b_q   (all sample-invariant)
    w_mu_comb = jnp.dot(w_mu_ref[...], w_q,
                        preferred_element_type=jnp.float32)     # [d_model, 128]
    common = (jnp.dot(h, w_mu_comb, preferred_element_type=jnp.float32)
              + jnp.dot(base_rows_ref[...], w_q, preferred_element_type=jnp.float32)
              + b_q_ref[...])                                   # [B*P, 128]

    # ---- batched Bayesian deltas: ONE VPU op + TWO wide matmuls for all S ------
    # delta parameters for all samples, lane-concatenated sample-major;
    # last sublane row carries the bias noise.
    delta_params = sigma_wb_ref[...] * eps_wb_ref[...]          # [d_model+1, S*c_eval]
    comb = jnp.dot(delta_params, w_q_bd_ref[...],
                   preferred_element_type=jnp.float32)          # [d_model+1, S*128]
    w_delta_comb = comb[:D, :]                                  # [d_model, S*128]
    b_delta_lane = comb[D:D + 1, :]                             # [1, S*128]
    y_delta = jnp.dot(h, w_delta_comb,
                      preferred_element_type=jnp.float32) + b_delta_lane  # [B*P, S*128]

    # ---- streaming per-sample stores + online (unbiased) statistics ------------
    sum_d = jnp.zeros((BP, CP), jnp.float32)
    sumsq_d = jnp.zeros((BP, CP), jnp.float32)
    for s in range(S):                                          # static unroll, S small
        d_s = y_delta[:, s * CP:(s + 1) * CP]                   # vreg-aligned lane slice
        pred_ref[s] = (common + d_s).reshape(B, P, CP)
        sum_d = sum_d + d_s
        sumsq_d = sumsq_d + d_s * d_s

    inv_s = 1.0 / S
    mean_d = sum_d * inv_s
    # unbiased variance over samples (offsets cancel, computed on centred deltas);
    # max(S-1,1) guards S==1 (torch.var(unbiased=True) would give NaN there).
    var = (sumsq_d - sum_d * mean_d) * (1.0 / max(S - 1, 1))
    var = jnp.maximum(var, 0.0)
    mean_ref[...] = (common + mean_d).reshape(B, P, CP)
    var_ref[...] = var.reshape(B, P, CP)
    std_ref[...] = jnp.sqrt(var).reshape(B, P, CP)


# -----------------------------------------------------------------------------
# Stats-free point forward kernel (single weight sample, prediction only)
# -----------------------------------------------------------------------------
def _point_forward_kernel(dec_ref, base_rows_ref, w_emb_ref, b_emb_ref,
                          w_mu_ref, sigma_w_ref, eps_w_ref,
                          sigma_b_ref, eps_b_ref, w_q_ref, b_q_ref,
                          pred_ref):
    B, P, CP = pred_ref.shape
    h = jnp.dot(dec_ref[...], w_emb_ref[...],
                preferred_element_type=jnp.float32) + b_emb_ref[...]
    h = jax.nn.gelu(h, approximate=True)                        # [B*P, d_model]

    w_q = w_q_ref[...]
    w_s = w_mu_ref[...] + sigma_w_ref[...] * eps_w_ref[...]     # sampled weights
    w_comb = jnp.dot(w_s, w_q, preferred_element_type=jnp.float32)
    rows = base_rows_ref[...] + sigma_b_ref[...] * eps_b_ref[...]   # trend + b_mu + delta_b
    y = (jnp.dot(h, w_comb, preferred_element_type=jnp.float32)
         + jnp.dot(rows, w_q, preferred_element_type=jnp.float32)
         + b_q_ref[...])
    pred_ref[...] = y.reshape(B, P, CP)


# -----------------------------------------------------------------------------
# Module wrapper
# -----------------------------------------------------------------------------
class BayesianEnhancedAutoformerPallas:
    def __init__(self, *, enc_in=4, dec_in=4, c_out_evaluation=4, d_model=32,
                 mark_dim=4, label_len=4, pred_len=8,
                 quantile_levels=(0.1, 0.5, 0.9), n_samples=8, key=None):
        assert enc_in == c_out_evaluation, "trend init requires enc_in == c_out_evaluation"
        self.enc_in = enc_in
        self.dec_in = dec_in
        self.c_eval = c_out_evaluation
        self.d_model = d_model
        self.mark_dim = mark_dim
        self.label_len = label_len
        self.pred_len = pred_len
        self.quantiles = sorted(quantile_levels)
        self.num_quantiles = len(self.quantiles)
        self.c_out = c_out_evaluation * self.num_quantiles
        assert self.c_out <= C_PAD
        self.n_samples = n_samples

        if key is None:
            key = jax.random.PRNGKey(0)
        k = jax.random.split(key, 8)
        din = dec_in + mark_dim
        c = self.c_eval
        S = n_samples

        # decoder embedding
        self.w_emb = (0.1 * jax.random.normal(k[0], (din, d_model))).astype(jnp.float32)
        self.b_emb = jnp.zeros((1, d_model), jnp.float32)
        # Bayesian projection (d_model -> c_eval)
        self.w_mu = (0.1 * jax.random.normal(k[1], (d_model, c))).astype(jnp.float32)
        self.w_rho = jnp.full((d_model, c), -3.0, jnp.float32)
        self.b_mu = jnp.zeros((1, c), jnp.float32)
        self.b_rho = jnp.full((1, c), -3.0, jnp.float32)
        # sigma = softplus(rho): sample/input-invariant -> precompute once (hoisted)
        self.sigma_w = jax.nn.softplus(self.w_rho)
        self.sigma_b = jax.nn.softplus(self.b_rho)
        # quantile expansion (c_eval -> c_out), zero-padded to C_PAD lanes so every
        # store / matmul output inside the kernel is lane-dense (unmasked 128-wide)
        self.w_q = (0.1 * jax.random.normal(k[2], (c, self.c_out))).astype(jnp.float32)
        self.b_q = jnp.zeros((1, self.c_out), jnp.float32)
        self.w_q_pad = jnp.zeros((c, C_PAD), jnp.float32).at[:, :self.c_out].set(self.w_q)
        self.b_q_pad = jnp.zeros((1, C_PAD), jnp.float32).at[:, :self.c_out].set(self.b_q)
        # deterministic Monte-Carlo noise for the Bayesian weight sampling
        self.eps_w = jax.random.normal(k[3], (S, d_model, c)).astype(jnp.float32)
        self.eps_b = jax.random.normal(k[4], (S, c)).astype(jnp.float32)

        # --- precomputed batched-delta layout (parameter-only, input-invariant) ---
        # lane-concatenated (sample-major) noise; last sublane row = bias noise
        eps_w_t = jnp.transpose(self.eps_w, (1, 0, 2)).reshape(d_model, S * c)
        eps_b_t = self.eps_b.reshape(1, S * c)
        self.eps_wb_t = jnp.concatenate([eps_w_t, eps_b_t], axis=0)        # [d_model+1, S*c]
        self.sigma_wb_tiled = jnp.concatenate(
            [jnp.tile(self.sigma_w, (1, S)), jnp.tile(self.sigma_b, (1, S))],
            axis=0)                                                         # [d_model+1, S*c]
        # block-diagonal quantile expansion matching the lane-concatenated layout
        bd = jnp.zeros((S * c, S * C_PAD), jnp.float32)
        for s in range(S):
            bd = bd.at[s * c:(s + 1) * c, s * C_PAD:(s + 1) * C_PAD].set(self.w_q_pad)
        self.w_q_blockdiag = bd                                             # [S*c, S*128]

    # ---- XLA-side layout plumbing (free: fused by XLA) --------------------------
    def _prep_inputs(self, x_enc, x_dec, x_mark_dec):
        B = x_enc.shape[0]
        L = x_dec.shape[1]
        P = self.pred_len
        din = self.dec_in + self.mark_dim
        dec_cat = jnp.concatenate([x_dec, x_mark_dec], axis=-1).astype(jnp.float32)
        dec_flat = dec_cat[:, L - P:, :].reshape(B * P, din)
        # decomposition-style trend init: time-mean of the encoder series,
        # repeated over the prediction horizon, with the Bayesian mean bias folded in
        trend = jnp.mean(x_enc.astype(jnp.float32), axis=1)                 # [B, c_eval]
        base_rows = jnp.repeat(trend, P, axis=0) + self.b_mu                # [B*P, c_eval]
        return dec_flat, base_rows, B, P

    # ---- fused Bayesian forward: S predictions + mean/var/std in one kernel -----
    def _run_sampled_forward(self, x_enc, x_dec, x_mark_dec):
        dec_flat, base_rows, B, P = self._prep_inputs(x_enc, x_dec, x_mark_dec)
        S = self.n_samples

        pred_pad, mean_pad, var_pad, std_pad = pl.pallas_call(
            _bayesian_forward_kernel,
            out_shape=(
                jax.ShapeDtypeStruct((S, B, P, C_PAD), jnp.float32),
                jax.ShapeDtypeStruct((B, P, C_PAD), jnp.float32),
                jax.ShapeDtypeStruct((B, P, C_PAD), jnp.float32),
                jax.ShapeDtypeStruct((B, P, C_PAD), jnp.float32),
            ),
        )(dec_flat, base_rows, self.w_emb, self.b_emb, self.w_mu,
          self.sigma_wb_tiled, self.eps_wb_t,
          self.w_q_pad, self.b_q_pad, self.w_q_blockdiag)

        co = self.c_out
        return (pred_pad[..., :co], mean_pad[..., :co],
                var_pad[..., :co], std_pad[..., :co])

    # ---- stats-free point forward (single weight sample) ------------------------
    def _single_forward(self, x_enc, x_mark_enc, x_dec, x_mark_dec):
        dec_flat, base_rows, B, P = self._prep_inputs(x_enc, x_dec, x_mark_dec)
        pred_pad = pl.pallas_call(
            _point_forward_kernel,
            out_shape=jax.ShapeDtypeStruct((B, P, C_PAD), jnp.float32),
        )(dec_flat, base_rows, self.w_emb, self.b_emb, self.w_mu,
          self.sigma_w, self.eps_w[0], self.sigma_b, self.eps_b[0:1],
          self.w_q_pad, self.b_q_pad)
        return pred_pad[..., :self.c_out]

    # ---- plain-JAX glue matching _compute_confidence_intervals ------------------
    # TODO(synk): torch.quantile (sort over n_samples) has no clean Pallas lowering;
    #             computed in plain JAX here (same linear-interpolation semantics).
    @staticmethod
    def _confidence_intervals(pred_stack, confidence_levels=(0.68, 0.95, 0.99)):
        intervals = {}
        for conf in confidence_levels:
            alpha = 1.0 - conf
            lo = jnp.quantile(pred_stack, alpha / 2.0, axis=0)
            hi = jnp.quantile(pred_stack, 1.0 - alpha / 2.0, axis=0)
            intervals[f'{int(conf * 100)}%'] = {'lower': lo, 'upper': hi, 'width': hi - lo}
        return intervals

    def _quantile_uncertainty(self, pred_stack, mean, std):
        n_q = self.num_quantiles
        fpq = pred_stack.shape[3] // n_q
        results = {}
        for i, q in enumerate(self.quantiles):
            s, e = i * fpq, (i + 1) * fpq
            q_pred = pred_stack[:, :, :, s:e]
            q_mean = mean[:, :, s:e]
            q_std = std[:, :, s:e]
            q_ci = {}
            for conf in (0.68, 0.95):
                alpha = 1.0 - conf
                lo = jnp.quantile(q_pred, alpha / 2.0, axis=0)
                hi = jnp.quantile(q_pred, 1.0 - alpha / 2.0, axis=0)
                q_ci[f'{int(conf * 100)}%'] = {'lower': lo, 'upper': hi, 'width': hi - lo}
            cv = q_std / (jnp.abs(q_mean) + 1e-8)
            results[f'quantile_{q}'] = {
                'prediction': q_mean,
                'uncertainty': q_std,
                'confidence_intervals': q_ci,
                'certainty_score': 1.0 / (1.0 + cv),
            }
        return {'quantile_specific': results}

    def forward(self, x_enc, x_mark_enc, x_dec, x_mark_dec,
                return_uncertainty=False, detailed_uncertainty=False):
        if not return_uncertainty:
            return self._single_forward(x_enc, x_mark_enc, x_dec, x_mark_dec)

        pred_stack, mean, var, std = self._run_sampled_forward(x_enc, x_dec, x_mark_dec)
        result = {
            'prediction': mean,
            'uncertainty': std,
            'variance': var,
            'confidence_intervals': self._confidence_intervals(pred_stack),
            'predictions_samples': pred_stack if detailed_uncertainty else None,
        }
        result.update(self._quantile_uncertainty(pred_stack, mean, std))
        if detailed_uncertainty:
            epistemic_var = var * 0.7
            aleatoric_var = var - epistemic_var
            result.update({
                'epistemic_uncertainty': jnp.sqrt(epistemic_var),
                'aleatoric_uncertainty': jnp.sqrt(aleatoric_var),
                'total_uncertainty_decomposed': jnp.sqrt(var),
            })
        return result


if __name__ == "__main__":
    key = jax.random.PRNGKey(0)
    k_in = jax.random.split(key, 5)

    B, seq_len, label_len, pred_len = 2, 8, 4, 8
    enc_in = dec_in = c_eval = 4
    mark_dim = 4
    L_dec = label_len + pred_len

    x_enc = jax.random.normal(k_in[0], (B, seq_len, enc_in), jnp.float32)
    x_mark_enc = jax.random.normal(k_in[1], (B, seq_len, mark_dim), jnp.float32)
    x_dec = jax.random.normal(k_in[2], (B, L_dec, dec_in), jnp.float32)
    x_mark_dec = jax.random.normal(k_in[3], (B, L_dec, mark_dim), jnp.float32)

    model = BayesianEnhancedAutoformerPallas(
        enc_in=enc_in, dec_in=dec_in, c_out_evaluation=c_eval, d_model=32,
        mark_dim=mark_dim, label_len=label_len, pred_len=pred_len,
        quantile_levels=(0.1, 0.5, 0.9), n_samples=8, key=k_in[4])

    # point (no-uncertainty) forward: stats-free kernel
    point = model.forward(x_enc, x_mark_enc, x_dec, x_mark_dec, return_uncertainty=False)
    jax.block_until_ready(point)
    assert point.shape == (B, pred_len, c_eval * 3)

    # Bayesian uncertainty forward (fused: samples + mean/var/std in one kernel)
    out = model.forward(x_enc, x_mark_enc, x_dec, x_mark_dec,
                        return_uncertainty=True, detailed_uncertainty=True)
    jax.block_until_ready(out['prediction'])
    jax.block_until_ready(out['uncertainty'])
    jax.block_until_ready(out['confidence_intervals']['95%']['width'])
    assert out['prediction'].shape == (B, pred_len, c_eval * 3)
    assert out['predictions_samples'].shape == (8, B, pred_len, c_eval * 3)
    assert out['uncertainty'].shape == (B, pred_len, c_eval * 3)

    print("KERNEL_OK")
</pallas_src>

<mosaic_0001>
module attributes {stable_mosaic.version = 11 : i64} {
  func.func @_point_forward_kernel(%arg0: memref<16x8xf32, #tpu.memory_space<vmem>>, %arg1: memref<16x4xf32, #tpu.memory_space<vmem>>, %arg2: memref<8x32xf32, #tpu.memory_space<vmem>>, %arg3: memref<1x32xf32, #tpu.memory_space<vmem>>, %arg4: memref<32x4xf32, #tpu.memory_space<vmem>>, %arg5: memref<32x4xf32, #tpu.memory_space<vmem>>, %arg6: memref<32x4xf32, #tpu.memory_space<vmem>>, %arg7: memref<1x4xf32, #tpu.memory_space<vmem>>, %arg8: memref<1x4xf32, #tpu.memory_space<vmem>>, %arg9: memref<4x128xf32, #tpu.memory_space<vmem>>, %arg10: memref<1x128xf32, #tpu.memory_space<vmem>>, %arg11: memref<2x8x128xf32, #tpu.memory_space<vmem>>) attributes {dimension_semantics = [], scalar_prefetch = 0 : i64, scratch_operands = 0 : i64, tpu.core_type = #tpu.core_type<tc>} {
    %c0 = arith.constant 0 : index
    %c0_0 = arith.constant 0 : index
    %0 = vector.load %arg0[%c0, %c0_0] : memref<16x8xf32, #tpu.memory_space<vmem>>, vector<16x8xf32>
    %c0_1 = arith.constant 0 : index
    %c0_2 = arith.constant 0 : index
    %1 = vector.load %arg2[%c0_1, %c0_2] : memref<8x32xf32, #tpu.memory_space<vmem>>, vector<8x32xf32>
    %cst = arith.constant dense<0.000000e+00> : vector<16x32xf32>
    %2 = tpu.matmul %0, %1, %cst {dimension_numbers = #tpu.dot_dimension_numbers<[1], [0], [0], [1], [0, 0, 1, 1], [], []>} : vector<16x8xf32>, vector<8x32xf32>, vector<16x32xf32> -> vector<16x32xf32>
    %c0_3 = arith.constant 0 : index
    %c0_4 = arith.constant 0 : index
    %3 = vector.load %arg3[%c0_3, %c0_4] : memref<1x32xf32, #tpu.memory_space<vmem>>, vector<1x32xf32>
    %4 = vector.broadcast %3 : vector<1x32xf32> to vector<16x32xf32>
    %5 = arith.addf %2, %4 : vector<16x32xf32>
    %6 = arith.mulf %5, %5 : vector<16x32xf32>
    %7 = arith.mulf %5, %6 : vector<16x32xf32>
    %cst_5 = arith.constant 4.471500e-02 : f32
    %8 = vector.broadcast %cst_5 : f32 to vector<16x32xf32>
    %9 = arith.mulf %8, %7 : vector<16x32xf32>
    %10 = arith.addf %5, %9 : vector<16x32xf32>
    %cst_6 = arith.constant 0.797884583 : f32
    %11 = vector.broadcast %cst_6 : f32 to vector<16x32xf32>
    %12 = arith.mulf %11, %10 : vector<16x32xf32>
    %13 = math.tanh %12 : vector<16x32xf32>
    %cst_7 = arith.constant 1.000000e+00 : f32
    %14 = vector.broadcast %cst_7 : f32 to vector<16x32xf32>
    %15 = arith.addf %14, %13 : vector<16x32xf32>
    %cst_8 = arith.constant 5.000000e-01 : f32
    %16 = vector.broadcast %cst_8 : f32 to vector<16x32xf32>
    %17 = arith.mulf %16, %15 : vector<16x32xf32>
    %18 = arith.mulf %5, %17 : vector<16x32xf32>
    %c0_9 = arith.constant 0 : index
    %c0_10 = arith.constant 0 : index
    %19 = vector.load %arg9[%c0_9, %c0_10] : memref<4x128xf32, #tpu.memory_space<vmem>>, vector<4x128xf32>
    %c0_11 = arith.constant 0 : index
    %c0_12 = arith.constant 0 : index
    %20 = vector.load %arg4[%c0_11, %c0_12] : memref<32x4xf32, #tpu.memory_space<vmem>>, vector<32x4xf32>
    %c0_13 = arith.constant 0 : index
    %c0_14 = arith.constant 0 : index
    %21 = vector.load %arg5[%c0_13, %c0_14] : memref<32x4xf32, #tpu.memory_space<vmem>>, vector<32x4xf32>
    %c0_15 = arith.constant 0 : index
    %c0_16 = arith.constant 0 : index
    %22 = vector.load %arg6[%c0_15, %c0_16] : memref<32x4xf32, #tpu.memory_space<vmem>>, vector<32x4xf32>
    %23 = arith.mulf %21, %22 : vector<32x4xf32>
    %24 = arith.addf %20, %23 : vector<32x4xf32>
    %cst_17 = arith.constant dense<0.000000e+00> : vector<32x128xf32>
    %25 = tpu.matmul %24, %19, %cst_17 {dimension_numbers = #tpu.dot_dimension_numbers<[1], [0], [0], [1], [0, 0, 1, 1], [], []>} : vector<32x4xf32>, vector<4x128xf32>, vector<32x128xf32> -> vector<32x128xf32>
    %c0_18 = arith.constant 0 : index
    %c0_19 = arith.constant 0 : index
    %26 = vector.load %arg1[%c0_18, %c0_19] : memref<16x4xf32, #tpu.memory_space<vmem>>, vector<16x4xf32>
    %c0_20 = arith.constant 0 : index
    %c0_21 = arith.constant 0 : index
    %27 = vector.load %arg7[%c0_20, %c0_21] : memref<1x4xf32, #tpu.memory_space<vmem>>, vector<1x4xf32>
    %c0_22 = arith.constant 0 : index
    %c0_23 = arith.constant 0 : index
    %28 = vector.load %arg8[%c0_22, %c0_23] : memref<1x4xf32, #tpu.memory_space<vmem>>, vector<1x4xf32>
    %29 = arith.mulf %27, %28 : vector<1x4xf32>
    %30 = vector.broadcast %29 : vector<1x4xf32> to vector<16x4xf32>
    %31 = arith.addf %26, %30 : vector<16x4xf32>
    %cst_24 = arith.constant dense<0.000000e+00> : vector<16x128xf32>
    %32 = tpu.matmul %18, %25, %cst_24 {dimension_numbers = #tpu.dot_dimension_numbers<[1], [0], [0], [1], [0, 0, 1, 1], [], []>} : vector<16x32xf32>, vector<32x128xf32>, vector<16x128xf32> -> vector<16x128xf32>
    %cst_25 = arith.constant dense<0.000000e+00> : vector<16x128xf32>
    %33 = tpu.matmul %31, %19, %cst_25 {dimension_numbers = #tpu.dot_dimension_numbers<[1], [0], [0], [1], [0, 0, 1, 1], [], []>} : vector<16x4xf32>, vector<4x128xf32>, vector<16x128xf32> -> vector<16x128xf32>
    %34 = arith.addf %32, %33 : vector<16x128xf32>
    %c0_26 = arith.constant 0 : index
    %c0_27 = arith.constant 0 : index
    %35 = vector.load %arg10[%c0_26, %c0_27] : memref<1x128xf32, #tpu.memory_space<vmem>>, vector<1x128xf32>
    %36 = vector.broadcast %35 : vector<1x128xf32> to vector<16x128xf32>
    %37 = arith.addf %34, %36 : vector<16x128xf32>
    %38 = vector.shape_cast %37 : vector<16x128xf32> to vector<2x8x128xf32>
    %c0_28 = arith.constant 0 : index
    %c0_29 = arith.constant 0 : index
    %c0_30 = arith.constant 0 : index
    %39 = vector.load %arg11[%c0_28, %c0_29, %c0_30] : memref<2x8x128xf32, #tpu.memory_space<vmem>>, vector<2x8x128xf32>
    tpu.vector_store %arg11[%c0_28, %c0_29, %c0_30], %38 {strides = array<i32>} : memref<2x8x128xf32, #tpu.memory_space<vmem>>, vector<2x8x128xf32>,
    return
  }
}

</mosaic_0001>

<llo_original>
// kernel: tpu_custom_call.1
$region0: #{tpu_custom_call.1}
  #allocation0 [shape = 'u32[]', space=smem, size = 0x4, offset = 0x4, fixed_abs, tag = 'smem constant byte address 0x4 - core index']
  #allocation1 [shape = 'u32[144,128]{1,0:T(1,128)}', space=vmem, size = 0x12000, scoped, tag = 'internal scratch']
  %s0 = inlined_call_operand.vmem [shape: f32[16,8], index: 0, kind: input, shape index: {}]
  %s1 = inlined_call_operand.vmem [shape: f32[16,4], index: 1, kind: input, shape index: {}]
  %s2 = inlined_call_operand.vmem [shape: f32[8,32], index: 2, kind: input, shape index: {}]
  %s3 = inlined_call_operand.vmem [shape: f32[1,32], index: 3, kind: input, shape index: {}]
  %s4 = inlined_call_operand.vmem [shape: f32[32,4], index: 4, kind: input, shape index: {}]
  %s5 = inlined_call_operand.vmem [shape: f32[32,4], index: 5, kind: input, shape index: {}]
  %s6 = inlined_call_operand.vmem [shape: f32[32,4], index: 6, kind: input, shape index: {}]
  %s7 = inlined_call_operand.vmem [shape: f32[1,4], index: 7, kind: input, shape index: {}]
  %s8 = inlined_call_operand.vmem [shape: f32[1,4], index: 8, kind: input, shape index: {}]
  %s9 = inlined_call_operand.vmem [shape: f32[4,128], index: 9, kind: input, shape index: {}]
  %s10 = inlined_call_operand.vmem [shape: f32[1,128], index: 10, kind: input, shape index: {}]
  %s11 = inlined_call_operand.hbm [shape: f32[2,8,128], index: 11, kind: output, shape index: {}]
  %s12 = sld [smem:[#allocation0]]
  $region54: #{tpu_custom_call.1} parent=0
    _
  %s14 = ssub.s32 1, %s12
  %s15 = scalar_select 0, %s14, %s12
  $region1: #{tpu_custom_call.1} parent=0
    #allocation2 [shape = 'u8[8192]{0}', space=vmem, size = 0x2000, scoped, tag = 'output window, operand 0, single buffered']
    #allocation3 [shape = 's32[1]{0}', space=sflag, size = 0x4, scoped, tag = 'scoped memory for tpu_custom_call.1']
    %16 = vsyncpa [#allocation3], 0
    // Predicated region
    $region2: #{tpu_custom_call.1} parent=1 // pred_check
      _
    $region3: #{tpu_custom_call.1} parent=1 // pred_check_branch
      %18 = sbr.rel (0) target = $region5
    $region4: #{tpu_custom_call.1} parent=1 // pred_region
      _
    $region5: #{tpu_custom_call.1} parent=1 // pred_fallthru
      _
    // Predicated region
    $region6: #{tpu_custom_call.1} parent=1 // pred_check
      _
    $region7: #{tpu_custom_call.1} parent=1 // pred_check_branch
      %20 = sbr.rel (0) target = $region9
    $region8: #{tpu_custom_call.1} parent=1 // pred_region
      _
    $region9: #{tpu_custom_call.1} parent=1 // pred_fallthru
      _
    // Predicated region
    $region10: #{tpu_custom_call.1} parent=1 // pred_check
      _
    $region11: #{tpu_custom_call.1} parent=1 // pred_check_branch
      %22 = sbr.rel (0) target = $region13
    $region12: #{tpu_custom_call.1} parent=1 // pred_region
      _
    $region13: #{tpu_custom_call.1} parent=1 // pred_fallthru
      _
    // Predicated region
    $region14: #{tpu_custom_call.1} parent=1 // pred_check
      _
    $region15: #{tpu_custom_call.1} parent=1 // pred_check_branch
      %24 = sbr.rel (0) target = $region17
    $region16: #{tpu_custom_call.1} parent=1 // pred_region
      _
    $region17: #{tpu_custom_call.1} parent=1 // pred_fallthru
      _
    // Predicated region
    $region18: #{tpu_custom_call.1} parent=1 // pred_check
      _
    $region19: #{tpu_custom_call.1} parent=1 // pred_check_branch
      %26 = sbr.rel (0) target = $region21
    $region20: #{tpu_custom_call.1} parent=1 // pred_region
      _
    $region21: #{tpu_custom_call.1} parent=1 // pred_fallthru
      _
    // Predicated region
    $region22: #{tpu_custom_call.1} parent=1 // pred_check
      _
    $region23: #{tpu_custom_call.1} parent=1 // pred_check_branch
      %28 = sbr.rel (0) target = $region25
    $region24: #{tpu_custom_call.1} parent=1 // pred_region
      _
    $region25: #{tpu_custom_call.1} parent=1 // pred_fallthru
      _
    // Predicated region
    $region26: #{tpu_custom_call.1} parent=1 // pred_check
      _
    $region27: #{tpu_custom_call.1} parent=1 // pred_check_branch
      %30 = sbr.rel (0) target = $region29
    $region28: #{tpu_custom_call.1} parent=1 // pred_region
      _
    $region29: #{tpu_custom_call.1} parent=1 // pred_fallthru
      _
    // Predicated region
    $region30: #{tpu_custom_call.1} parent=1 // pred_check
      _
    $region31: #{tpu_custom_call.1} parent=1 // pred_check_branch
      %32 = sbr.rel (0) target = $region33
    $region32: #{tpu_custom_call.1} parent=1 // pred_region
      _
    $region33: #{tpu_custom_call.1} parent=1 // pred_fallthru
      _
    // Predicated region
    $region34: #{tpu_custom_call.1} parent=1 // pred_check
      _
    $region35: #{tpu_custom_call.1} parent=1 // pred_check_branch
      %34 = sbr.rel (0) target = $region37
    $region36: #{tpu_custom_call.1} parent=1 // pred_region
      _
    $region37: #{tpu_custom_call.1} parent=1 // pred_fallthru
      _
    // Predicated region
    $region38: #{tpu_custom_call.1} parent=1 // pred_check
      _
    $region39: #{tpu_custom_call.1} parent=1 // pred_check_branch
      %36 = sbr.rel (0) target = $region41
    $region40: #{tpu_custom_call.1} parent=1 // pred_region
      _
    $region41: #{tpu_custom_call.1} parent=1 // pred_fallthru
      _
    // Predicated region
    $region42: #{tpu_custom_call.1} parent=1 // pred_check
      _
    $region43: #{tpu_custom_call.1} parent=1 // pred_check_branch
      %38 = sbr.rel (0) target = $region45
    $region44: #{tpu_custom_call.1} parent=1 // pred_region
      _
    $region45: #{tpu_custom_call.1} parent=1 // pred_fallthru
      _
    %v39 = vld [vmem:[%s0] sm:$0xff]
    %v40 = vld [vmem:[%s0 + $0x8] sm:$0xff]
    %v41 = vld [vmem:[%s2] sm:$0xff]
    %v42 = vld [vmem:[%s3] sm:$0x1]
    %v44 = vlaneseq
    %v45 = vshrl.u32 %v44, 7
    %v46 = vsub.s32 0, %v45
    %v47 = vrot.slane %v42, %v46
    %vm49 = vcmask 64512
    %v51 = vsel %vm49, %v39, 0
    %v54 = vsel %vm49, %v40, 0
    %56 = vmatprep.subr.mxu0 0.0
    %57 = vmatpush1.msra.mxu0 %v41
    %58 = vmatprep.subr.mxu0 0.0
    %59 = vmatpush1.msra.mxu0 0.0
    %60 = vmatprep.subr.mxu0 0.0
    %61 = vmatpush1.msra.mxu0 0.0
    %62 = vmatprep.subr.mxu0 0.0
    %63 = vmatpush1.msra.mxu0 0.0
    %64 = vmatprep.subr.mxu0 0.0
    %65 = vmatpush1.msra.mxu0 0.0
    %66 = vmatprep.subr.mxu0 0.0
    %67 = vmatpush1.msra.mxu0 0.0
    %68 = vmatprep.subr.mxu0 0.0
    %69 = vmatpush1.msra.mxu0 0.0
    %70 = vmatprep.subr.mxu0 0.0
    %71 = vmatpush1.msra.mxu0 0.0
    %72 = vmatprep.subr.mxu0 0.0
    %73 = vmatpush1.msra.mxu0 0.0
    %74 = vmatprep.subr.mxu0 0.0
    %75 = vmatpush1.msra.mxu0 0.0
    %76 = vmatprep.subr.mxu0 0.0
    %77 = vmatpush1.msra.mxu0 0.0
    %78 = vmatprep.subr.mxu0 0.0
    %79 = vmatpush1.msra.mxu0 0.0
    %80 = vmatprep.subr.mxu0 0.0
    %81 = vmatpush1.msra.mxu0 0.0
    %82 = vmatprep.subr.mxu0 0.0
    %83 = vmatpush1.msra.mxu0 0.0
    %84 = vmatprep.subr.mxu0 0.0
    %85 = vmatpush1.msra.mxu0 0.0
    %86 = vmatprep.subr.mxu0 0.0
    %87 = vmatpush1.msra.mxu0 0.0
    %88 = vmatprep.subr.mxu0 0.0
    %89 = vmatpush1.msra.mxu0 0.0
    %90 = vmatprep.subr.mxu0 0.0
    %91 = vmatpush1.msra.mxu0 0.0
    %92 = vmatprep.subr.mxu0 0.0
    %93 = vmatpush1.msra.mxu0 0.0
    %94 = vmatprep.subr.mxu0 0.0
    %95 = vmatpush1.msra.mxu0 0.0
    %96 = vmatprep.subr.mxu0 0.0
    %97 = vmatpush1.msra.mxu0 0.0
    %98 = vmatprep.subr.mxu0 0.0
    %99 = vmatpush1.msra.mxu0 0.0
    %100 = vmatprep.subr.mxu0 0.0
    %101 = vmatpush1.msra.mxu0 0.0
    %102 = vmatprep.subr.mxu0 0.0
    %103 = vmatpush1.msra.mxu0 0.0
    %104 = vmatprep.subr.mxu0 0.0
    %105 = vmatpush1.msra.mxu0 0.0
    %106 = vmatprep.subr.mxu0 0.0
    %107 = vmatpush1.msra.mxu0 0.0
    %108 = vmatprep.subr.mxu0 0.0
    %109 = vmatpush1.msra.mxu0 0.0
    %110 = vmatprep.subr.mxu0 0.0
    %111 = vmatpush1.msra.mxu0 0.0
    %112 = vmatprep.subr.mxu0 0.0
    %113 = vmatpush1.msra.mxu0 0.0
    %114 = vmatprep.subr.mxu0 0.0
    %115 = vmatpush1.msra.mxu0 0.0
    %116 = vmatprep.subr.mxu0 0.0
    %117 = vmatpush1.msra.mxu0 0.0
    %118 = vmatprep.subr.mxu0 0.0
    %119 = vmatpush1.msra.mxu0 0.0
    %120 = vmatprep.mubr.f32.mxu0 0.0
    %121 = vmatmul.mubr.f32.gmra.mrb[0].mxu0 %v51
    %v122 = vpop.f32.mrb[0].mxu0
    %v123 = vadd.f32 %v47, %v122
    %v124 = vpop.f32.mrb[0].mxu0
    %125 = vmatprep.mubr.f32.mxu0 0.0
    %126 = vmatmul.mubr.f32.gmra.mrb[0].mxu0 %v54
    %v127 = vpop.f32.mrb[0].mxu0
    %v128 = vadd.f32 %v47, %v127
    %v129 = vpop.f32.mrb[0].mxu0
    %130 = vdwg.mxu0
    %v131 = vmul.f32 %v123, %v123
    %v132 = vmul.f32 %v128, %v128
    %v133 = vmul.f32 %v123, %v131
    %v134 = vmul.f32 %v128, %v132
    %v135 = vmul.f32 %v133, 0.044715
    %v136 = vmul.f32 %v134, 0.044715
    %v137 = vadd.f32 %v123, %v135
    %v138 = vadd.f32 %v128, %v136
    %v139 = vmul.f32 %v137, 0.7978846
    %v140 = vmul.f32 %v138, 0.7978846
    %v141 = vtanh.pop %v139
    %v142 = vtanh.pop %v140
    %v143 = vadd.f32 %v141, 1.0
    %v144 = vadd.f32 %v142, 1.0
    %v145 = vmul.f32 %v143, 0.5
    %v146 = vmul.f32 %v144, 0.5
    %v147 = vmul.f32 %v123, %v145
    %v148 = vmul.f32 %v128, %v146
    %v149 = vld [vmem:[%s9] sm:$0xf]
    %v150 = vld [vmem:[%s4] sm:$0xff]
    %v151 = vld [vmem:[%s4 + $0x8] sm:$0xff]
    %v152 = vld [vmem:[%s4 + $0x10] sm:$0xff]
    %v153 = vld [vmem:[%s4 + $0x18] sm:$0xff]
    %v154 = vld [vmem:[%s5] sm:$0xff]
    %v155 = vld [vmem:[%s5 + $0x8] sm:$0xff]
    %v156 = vld [vmem:[%s5 + $0x10] sm:$0xff]
    %v157 = vld [vmem:[%s5 + $0x18] sm:$0xff]
    %v158 = vld [vmem:[%s6] sm:$0xff]
    %v159 = vld [vmem:[%s6 + $0x8] sm:$0xff]
    %v160 = vld [vmem:[%s6 + $0x10] sm:$0xff]
    %v161 = vld [vmem:[%s6 + $0x18] sm:$0xff]
    %v162 = vmul.f32 %v154, %v158
    %v163 = vmul.f32 %v155, %v159
    %v164 = vmul.f32 %v156, %v160
    %v165 = vmul.f32 %v157, %v161
    %v166 = vadd.f32 %v150, %v162
    %v167 = vadd.f32 %v151, %v163
    %v168 = vadd.f32 %v152, %v164
    %v169 = vadd.f32 %v153, %v165
    %vm170 = vcmask 31744
    %v172 = vsel %vm170, %v166, 0
    %v175 = vsel %vm170, %v167, 0
    %v178 = vsel %vm170, %v168, 0
    %v181 = vsel %vm170, %v169, 0
    %vm183 = vcmask 1043456
    %v185 = vsel %vm183, %v149, 0
    %187 = vmatprep.subr.mxu0 0.0
    %188 = vmatpush1.msra.mxu0 %v185
    %189 = vmatprep.subr.mxu0 0.0
    %190 = vmatpush1.msra.mxu0 0.0
    %191 = vmatprep.subr.mxu0 0.0
    %192 = vmatpush1.msra.mxu0 0.0
    %193 = vmatprep.subr.mxu0 0.0
    %194 = vmatpush1.msra.mxu0 0.0
    %195 = vmatprep.subr.mxu0 0.0
    %196 = vmatpush1.msra.mxu0 0.0
    %197 = vmatprep.subr.mxu0 0.0
    %198 = vmatpush1.msra.mxu0 0.0
    %199 = vmatprep.subr.mxu0 0.0
    %200 = vmatpush1.msra.mxu0 0.0
    %201 = vmatprep.subr.mxu0 0.0
    %202 = vmatpush1.msra.mxu0 0.0
    %203 = vmatprep.subr.mxu0 0.0
    %204 = vmatpush1.msra.mxu0 0.0
    %205 = vmatprep.subr.mxu0 0.0
    %206 = vmatpush1.msra.mxu0 0.0
    %207 = vmatprep.subr.mxu0 0.0
    %208 = vmatpush1.msra.mxu0 0.0
    %209 = vmatprep.subr.mxu0 0.0
    %210 = vmatpush1.msra.mxu0 0.0
    %211 = vmatprep.subr.mxu0 0.0
    %212 = vmatpush1.msra.mxu0 0.0
    %213 = vmatprep.subr.mxu0 0.0
    %214 = vmatpush1.msra.mxu0 0.0
    %215 = vmatprep.subr.mxu0 0.0
    %216 = vmatpush1.msra.mxu0 0.0
    %217 = vmatprep.subr.mxu0 0.0
    %218 = vmatpush1.msra.mxu0 0.0
    %219 = vmatprep.subr.mxu0 0.0
    %220 = vmatpush1.msra.mxu0 0.0
    %221 = vmatprep.subr.mxu0 0.0
    %222 = vmatpush1.msra.mxu0 0.0
    %223 = vmatprep.subr.mxu0 0.0
    %224 = vmatpush1.msra.mxu0 0.0
    %225 = vmatprep.subr.mxu0 0.0
    %226 = vmatpush1.msra.mxu0 0.0
    %227 = vmatprep.subr.mxu0 0.0
    %228 = vmatpush1.msra.mxu0 0.0
    %229 = vmatprep.subr.mxu0 0.0
    %230 = vmatpush1.msra.mxu0 0.0
    %231 = vmatprep.subr.mxu0 0.0
    %232 = vmatpush1.msra.mxu0 0.0
    %233 = vmatprep.subr.mxu0 0.0
    %234 = vmatpush1.msra.mxu0 0.0
    %235 = vmatprep.subr.mxu0 0.0
    %236 = vmatpush1.msra.mxu0 0.0
    %237 = vmatprep.subr.mxu0 0.0
    %238 = vmatpush1.msra.mxu0 0.0
    %239 = vmatprep.subr.mxu0 0.0
    %240 = vmatpush1.msra.mxu0 0.0
    %241 = vmatprep.subr.mxu0 0.0
    %242 = vmatpush1.msra.mxu0 0.0
    %243 = vmatprep.subr.mxu0 0.0
    %244 = vmatpush1.msra.mxu0 0.0
    %245 = vmatprep.subr.mxu0 0.0
    %246 = vmatpush1.msra.mxu0 0.0
    %247 = vmatprep.subr.mxu0 0.0
    %248 = vmatpush1.msra.mxu0 0.0
    %249 = vmatprep.subr.mxu0 0.0
    %250 = vmatpush1.msra.mxu0 0.0
    %251 = vmatprep.mubr.f32.mxu0 0.0
    %252 = vmatmul.mubr.f32.gmra.mrb[0].mxu0 %v172
    %v253 = vpop.f32.mrb[0].mxu0
    %v254 = vadd.f32 0.0, %v253
    %v255 = vpop.f32.mrb[0].mxu0
    %256 = vmatprep.mubr.f32.mxu0 0.0
    %257 = vmatmul.mubr.f32.gmra.mrb[0].mxu0 %v175
    %v258 = vpop.f32.mrb[0].mxu0
    %v259 = vadd.f32 0.0, %v258
    %v260 = vpop.f32.mrb[0].mxu0
    %261 = vmatprep.mubr.f32.mxu0 0.0
    %262 = vmatmul.mubr.f32.gmra.mrb[0].mxu0 %v178
    %v263 = vpop.f32.mrb[0].mxu0
    %v264 = vadd.f32 0.0, %v263
    %v265 = vpop.f32.mrb[0].mxu0
    %266 = vmatprep.mubr.f32.mxu0 0.0
    %267 = vmatmul.mubr.f32.gmra.mrb[0].mxu0 %v181
    %v268 = vpop.f32.mrb[0].mxu0
    %v269 = vadd.f32 0.0, %v268
    %v270 = vpop.f32.mrb[0].mxu0
    %271 = vdwg.mxu0
    %v272 = vld [vmem:[%s1] sm:$0xff]
    %v273 = vld [vmem:[%s1 + $0x8] sm:$0xff]
    %v274 = vld [vmem:[%s7] sm:$0x1]
    %v275 = vld [vmem:[%s8] sm:$0x1]
    %v276 = vmul.f32 %v274, %v275
    %v278 = vlaneseq
    %v279 = vshrl.u32 %v278, 7
    %v280 = vsub.s32 0, %v279
    %v281 = vrot.slane %v276, %v280
    %v283 = vadd.f32 %v272, %v281
    %v284 = vadd.f32 %v273, %v281
    %v286 = vsel %vm170, %v283, 0
    %v289 = vsel %vm170, %v284, 0
    %291 = vmatprep.subr.mxu0 0.0
    %292 = vmatpush1.msra.mxu0 %v185
    %293 = vmatprep.subr.mxu0 0.0
    %294 = vmatpush1.msra.mxu0 0.0
    %295 = vmatprep.subr.mxu0 0.0
    %296 = vmatpush1.msra.mxu0 0.0
    %297 = vmatprep.subr.mxu0 0.0
    %298 = vmatpush1.msra.mxu0 0.0
    %299 = vmatprep.subr.mxu0 0.0
    %300 = vmatpush1.msra.mxu0 0.0
    %301 = vmatprep.subr.mxu0 0.0
    %302 = vmatpush1.msra.mxu0 0.0
    %303 = vmatprep.subr.mxu0 0.0
    %304 = vmatpush1.msra.mxu0 0.0
    %305 = vmatprep.subr.mxu0 0.0
    %306 = vmatpush1.msra.mxu0 0.0
    %307 = vmatprep.subr.mxu0 0.0
    %308 = vmatpush1.msra.mxu0 0.0
    %309 = vmatprep.subr.mxu0 0.0
    %310 = vmatpush1.msra.mxu0 0.0
    %311 = vmatprep.subr.mxu0 0.0
    %312 = vmatpush1.msra.mxu0 0.0
    %313 = vmatprep.subr.mxu0 0.0
    %314 = vmatpush1.msra.mxu0 0.0
    %315 = vmatprep.subr.mxu0 0.0
    %316 = vmatpush1.msra.mxu0 0.0
    %317 = vmatprep.subr.mxu0 0.0
    %318 = vmatpush1.msra.mxu0 0.0
    %319 = vmatprep.subr.mxu0 0.0
    %320 = vmatpush1.msra.mxu0 0.0
    %321 = vmatprep.subr.mxu0 0.0
    %322 = vmatpush1.msra.mxu0 0.0
    %323 = vmatprep.subr.mxu0 0.0
    %324 = vmatpush1.msra.mxu0 0.0
    %325 = vmatprep.subr.mxu0 0.0
    %326 = vmatpush1.msra.mxu0 0.0
    %327 = vmatprep.subr.mxu0 0.0
    %328 = vmatpush1.msra.mxu0 0.0
    %329 = vmatprep.subr.mxu0 0.0
    %330 = vmatpush1.msra.mxu0 0.0
    %331 = vmatprep.subr.mxu0 0.0
    %332 = vmatpush1.msra.mxu0 0.0
    %333 = vmatprep.subr.mxu0 0.0
    %334 = vmatpush1.msra.mxu0 0.0
    %335 = vmatprep.subr.mxu0 0.0
    %336 = vmatpush1.msra.mxu0 0.0
    %337 = vmatprep.subr.mxu0 0.0
    %338 = vmatpush1.msra.mxu0 0.0
    %339 = vmatprep.subr.mxu0 0.0
    %340 = vmatpush1.msra.mxu0 0.0
    %341 = vmatprep.subr.mxu0 0.0
    %342 = vmatpush1.msra.mxu0 0.0
    %343 = vmatprep.subr.mxu0 0.0
    %344 = vmatpush1.msra.mxu0 0.0
    %345 = vmatprep.subr.mxu0 0.0
    %346 = vmatpush1.msra.mxu0 0.0
    %347 = vmatprep.subr.mxu0 0.0
    %348 = vmatpush1.msra.mxu0 0.0
    %349 = vmatprep.subr.mxu0 0.0
    %350 = vmatpush1.msra.mxu0 0.0
    %351 = vmatprep.subr.mxu0 0.0
    %352 = vmatpush1.msra.mxu0 0.0
    %353 = vmatprep.subr.mxu0 0.0
    %354 = vmatpush1.msra.mxu0 0.0
    %355 = vmatprep.mubr.f32.mxu0 0.0
    %356 = vmatmul.mubr.f32.gmra.mrb[0].mxu0 %v286
    %v357 = vpop.f32.mrb[0].mxu0
    %v358 = vadd.f32 0.0, %v357
    %v359 = vpop.f32.mrb[0].mxu0
    %360 = vmatprep.mubr.f32.mxu0 0.0
    %361 = vmatmul.mubr.f32.gmra.mrb[0].mxu0 %v289
    %v362 = vpop.f32.mrb[0].mxu0
    %v363 = vadd.f32 0.0, %v362
    %v364 = vpop.f32.mrb[0].mxu0
    %365 = vdwg.mxu0
    %vm366 = vcmask 261120
    %v368 = vsel %vm366, %v147, 0
    %v371 = vsel %vm366, %v148, 0
    %373 = vmatprep.subr.mxu0 0.0
    %374 = vmatpush1.msra.mxu0 %v254
    %375 = vmatprep.subr.mxu0 0.0
    %376 = vmatpush1.msra.mxu0 %v259
    %377 = vmatprep.subr.mxu0 0.0
    %378 = vmatpush1.msra.mxu0 %v264
    %379 = vmatprep.subr.mxu0 0.0
    %380 = vmatpush1.msra.mxu0 %v269
    %381 = vmatprep.subr.mxu0 0.0
    %382 = vmatpush1.msra.mxu0 0.0
    %383 = vmatprep.subr.mxu0 0.0
    %384 = vmatpush1.msra.mxu0 0.0
    %385 = vmatprep.subr.mxu0 0.0
    %386 = vmatpush1.msra.mxu0 0.0
    %387 = vmatprep.subr.mxu0 0.0
    %388 = vmatpush1.msra.mxu0 0.0
    %389 = vmatprep.subr.mxu0 0.0
    %390 = vmatpush1.msra.mxu0 0.0
    %391 = vmatprep.subr.mxu0 0.0
    %392 = vmatpush1.msra.mxu0 0.0
    %393 = vmatprep.subr.mxu0 0.0
    %394 = vmatpush1.msra.mxu0 0.0
    %395 = vmatprep.subr.mxu0 0.0
    %396 = vmatpush1.msra.mxu0 0.0
    %397 = vmatprep.subr.mxu0 0.0
    %398 = vmatpush1.msra.mxu0 0.0
    %399 = vmatprep.subr.mxu0 0.0
    %400 = vmatpush1.msra.mxu0 0.0
    %401 = vmatprep.subr.mxu0 0.0
    %402 = vmatpush1.msra.mxu0 0.0
    %403 = vmatprep.subr.mxu0 0.0
    %404 = vmatpush1.msra.mxu0 0.0
    %405 = vmatprep.subr.mxu0 0.0
    %406 = vmatpush1.msra.mxu0 0.0
    %407 = vmatprep.subr.mxu0 0.0
    %408 = vmatpush1.msra.mxu0 0.0
    %409 = vmatprep.subr.mxu0 0.0
    %410 = vmatpush1.msra.mxu0 0.0
    %411 = vmatprep.subr.mxu0 0.0
    %412 = vmatpush1.msra.mxu0 0.0
    %413 = vmatprep.subr.mxu0 0.0
    %414 = vmatpush1.msra.mxu0 0.0
    %415 = vmatprep.subr.mxu0 0.0
    %416 = vmatpush1.msra.mxu0 0.0
    %417 = vmatprep.subr.mxu0 0.0
    %418 = vmatpush1.msra.mxu0 0.0
    %419 = vmatprep.subr.mxu0 0.0
    %420 = vmatpush1.msra.mxu0 0.0
    %421 = vmatprep.subr.mxu0 0.0
    %422 = vmatpush1.msra.mxu0 0.0
    %423 = vmatprep.subr.mxu0 0.0
    %424 = vmatpush1.msra.mxu0 0.0
    %425 = vmatprep.subr.mxu0 0.0
    %426 = vmatpush1.msra.mxu0 0.0
    %427 = vmatprep.subr.mxu0 0.0
    %428 = vmatpush1.msra.mxu0 0.0
    %429 = vmatprep.subr.mxu0 0.0
    %430 = vmatpush1.msra.mxu0 0.0
    %431 = vmatprep.subr.mxu0 0.0
    %432 = vmatpush1.msra.mxu0 0.0
    %433 = vmatprep.subr.mxu0 0.0
    %434 = vmatpush1.msra.mxu0 0.0
    %435 = vmatprep.subr.mxu0 0.0
    %436 = vmatpush1.msra.mxu0 0.0
    %437 = vmatprep.mubr.f32.mxu0 0.0
    %438 = vmatmul.mubr.f32.gmra.mrb[0].mxu0 %v368
    %v439 = vpop.f32.mrb[0].mxu0
    %v440 = vadd.f32 %v358, %v439
    %v441 = vpop.f32.mrb[0].mxu0
    %442 = vmatprep.mubr.f32.mxu0 0.0
    %443 = vmatmul.mubr.f32.gmra.mrb[0].mxu0 %v371
    %v444 = vpop.f32.mrb[0].mxu0
    %v445 = vadd.f32 %v363, %v444
    %v446 = vpop.f32.mrb[0].mxu0
    %447 = vdwg.mxu0
    %v448 = vld [vmem:[%s10] sm:$0x1]
    %v450 = vlaneseq
    %v451 = vshrl.u32 %v450, 7
    %v452 = vsub.s32 0, %v451
    %v453 = vrot.slane %v448, %v452
    %v455 = vadd.f32 %v440, %v453
    %v456 = vadd.f32 %v445, %v453
    %457 = vst [vmem:[#allocation2] sm:$0xff] %v455
    %458 = vst [vmem:[#allocation2 + $0x8] sm:$0xff] %v456
    // Predicated region
    $region46: #{tpu_custom_call.1} parent=1 // pred_check
      _
    $region47: #{tpu_custom_call.1} parent=1 // pred_check_branch
      %460 = sbr.rel (0) target = $region49
    $region48: #{tpu_custom_call.1} parent=1 // pred_region
      %s462 = ssub.s32 256, 256
      %463 = vsyncadd [#allocation3], %s462
      %s464 = sshll.u32 [#allocation2], 4
      %s465 = int_to_ptr.vmem [resolvable:$true] %s464
      %470 = dma.vmem_to_hbm [thread:$0]  %s465, 256, %s11, [#allocation3], 128, 128, 8
    $region49: #{tpu_custom_call.1} parent=1 // pred_fallthru
      _
    // Predicated region
    $region50: #{tpu_custom_call.1} parent=1 // pred_check
      _
    $region51: #{tpu_custom_call.1} parent=1 // pred_check_branch
      %472 = sbr.rel (0) target = $region53
    $region52: #{tpu_custom_call.1} parent=1 // pred_region
      %473 = dma.done [#allocation3], 256
    $region53: #{tpu_custom_call.1} parent=1 // pred_fallthru
      _
    %474 = vsyncpa [#allocation3], 1

</llo_original>
